<compile_context>
chip_gen: v7x
topology: tpu7x:2x2x1
jax: 0.10.0
libtpu: 0.0.40
codegen_flags: <defaults>
</compile_context>

<pallas_src>
import functools

import jax
import jax.numpy as jnp
from jax.experimental import pallas as pl
from jax.experimental.pallas import tpu as pltpu

_HI = jax.lax.Precision.HIGHEST

# bf16 adjacency bytes below which the single-call fused kernel is used
# (conservative for v7x's 64 MiB physical VMEM).
_FUSED_A_BYTES_MAX = 16 * 1024 * 1024


def _vmem_limit_bytes(tm, tk, d):
    """Scoped-VMEM request for the tiled kernel."""
    lane_d = max(d, 128)                       # lanes pad to 128 in VMEM
    need = (2 * tm * tk * 2                    # double-buffered bf16 A tiles
            + 2 * tk * lane_d * 2              # double-buffered bf16 B slices
            + 2 * tm * lane_d * 4              # output block buffers
            + tm * lane_d * 4)                 # f32 accumulator scratch
    # Generous headroom, but stay well under v7x's 64 MiB physical VMEM.
    return int(min(48 * 1024 * 1024, max(32 * 1024 * 1024, 4 * need)))


# --------------------------------------------------------------------------
# General path: K-tiled row-parallel  relu?(A @ B)  for skinny B.
# --------------------------------------------------------------------------
def propagate_kernel(a_ref, b_ref, o_ref, acc_ref, *, apply_relu):
    k = pl.program_id(1)

    @pl.when(k == 0)
    def _():
        acc_ref[...] = jnp.zeros_like(acc_ref)

    acc_ref[...] += jnp.dot(a_ref[...], b_ref[...],
                            preferred_element_type=jnp.float32)

    @pl.when(k == pl.num_programs(1) - 1)
    def _():
        out = acc_ref[...]
        if apply_relu:
            out = jnp.maximum(out, 0.0)
        o_ref[...] = out.astype(o_ref.dtype)


def propagate(a, b, *, apply_relu=False, tm=512, tk=512):
    """Row/K-tiled relu?(A @ B): A is (N, N) bf16, B is (N, D) bf16, D small.

    A streams through VMEM as (tm, tk) tiles (working set independent of N).
    B's D columns equal the full array dim, so the lane-sparse blocks are
    legal; the masked output stores are hidden under the dominant A DMA.
    """
    N = a.shape[0]
    D = b.shape[1]
    assert a.shape == (N, N) and b.shape[0] == N
    tm = min(tm, N)
    tk = min(tk, N)
    assert N % tm == 0 and N % tk == 0, "pad N to a multiple of the tile sizes"
    # bf16 min tile: sublane multiple of 16, lane multiple of 128.
    assert tm % 16 == 0 and tk % 128 == 0

    out_dtype = jnp.float32
    kernel = functools.partial(propagate_kernel, apply_relu=apply_relu)
    cost = pl.CostEstimate(
        flops=2 * N * N * D,
        transcendentals=0,
        bytes_accessed=(N * N * a.dtype.itemsize
                        + N * D * b.dtype.itemsize
                        + N * D * jnp.dtype(out_dtype).itemsize),
    )

    return pl.pallas_call(
        kernel,
        out_shape=jax.ShapeDtypeStruct((N, D), out_dtype),
        grid_spec=pltpu.PrefetchScalarGridSpec(
            num_scalar_prefetch=0,
            grid=(N // tm, N // tk),          # rows parallel, reduction (K) last
            in_specs=[
                pl.BlockSpec((tm, tk), lambda i, k: (i, k)),   # A tile (streams)
                pl.BlockSpec((tk, D), lambda i, k: (k, 0)),    # B K-slice
            ],
            out_specs=pl.BlockSpec((tm, D), lambda i, k: (i, 0)),
            scratch_shapes=[pltpu.VMEM((tm, D), jnp.float32)],
        ),
        compiler_params=pltpu.CompilerParams(
            dimension_semantics=("parallel", "arbitrary"),
            vmem_limit_bytes=_vmem_limit_bytes(tm, tk, D),
        ),
        cost_estimate=cost,
    )(a, b)


# --------------------------------------------------------------------------
# Small-graph path: both layers fused, adjacency resident in VMEM.
# --------------------------------------------------------------------------
def fused_small_kernel(a_ref, xw1_ref, w3_ref, o_ref):
    a = a_ref[...]                                                  # (N, N) bf16
    # Layer 1: H = relu(A @ (X W1)), f32 accumulation on the MXU.
    h = jnp.maximum(
        jnp.dot(a, xw1_ref[...], preferred_element_type=jnp.float32), 0.0)
    # Tiny (N, hidden) @ (hidden, out) matmul, f32.
    hw3 = jnp.dot(h, w3_ref[...], preferred_element_type=jnp.float32)
    # Layer 2: O = A @ (H W3); reuse the resident A (read from HBM only once).
    o_ref[...] = jnp.dot(a, hw3.astype(a.dtype),
                         preferred_element_type=jnp.float32).astype(o_ref.dtype)


def _cached_gcn_fused(a_bf16, xw1_bf16, w3_f32):
    N = a_bf16.shape[0]
    hid = xw1_bf16.shape[1]
    out_dim = w3_f32.shape[1]
    cost = pl.CostEstimate(
        flops=2 * N * N * (hid + out_dim) + 2 * N * hid * out_dim,
        transcendentals=0,
        bytes_accessed=(N * N * 2 + N * hid * 2 + hid * out_dim * 4
                        + N * out_dim * 4),
    )
    vmem_limit = int(min(48 * 1024 * 1024,
                         max(32 * 1024 * 1024, 2 * N * N * 2 + (8 << 20))))
    return pl.pallas_call(
        fused_small_kernel,
        out_shape=jax.ShapeDtypeStruct((N, out_dim), jnp.float32),
        compiler_params=pltpu.CompilerParams(vmem_limit_bytes=vmem_limit),
        cost_estimate=cost,
    )(a_bf16, xw1_bf16, w3_f32)


# --------------------------------------------------------------------------
# CachedGCN.forward
# --------------------------------------------------------------------------
def cached_gcn_forward(features, adj, w1, w3, *, use_fused=None, tm=512, tk=512):
    """CachedGCN.forward: O = A @ relu(A @ X @ W1) @ W3  (weight2 unused)."""
    N = adj.shape[0]
    a_bf16 = adj.astype(jnp.bfloat16)
    # Associativity hoist: the tiny feature-side matmul stays in XLA; the
    # Pallas kernels only see the skinny bf16 operand.
    xw1 = jnp.dot(features, w1, precision=_HI).astype(jnp.bfloat16)

    if use_fused is None:
        use_fused = (N * N * 2) <= _FUSED_A_BYTES_MAX
    if use_fused:
        return _cached_gcn_fused(a_bf16, xw1, w3.astype(jnp.float32))

    h = propagate(a_bf16, xw1, apply_relu=True, tm=tm, tk=tk)      # (N, hid) f32
    hw3 = jnp.dot(h, w3, precision=_HI).astype(jnp.bfloat16)       # (N, out)
    return propagate(a_bf16, hw3, apply_relu=False, tm=tm, tk=tk)


# --------------------------------------------------------------------------
# References
# --------------------------------------------------------------------------
def cached_gcn_reference(features, adj, w1, w3):
    """Pure-f32 reference of the PyTorch forward."""
    h = jnp.maximum(
        jnp.dot(jnp.dot(adj, features, precision=_HI), w1, precision=_HI), 0.0)
    return jnp.dot(jnp.dot(adj, h, precision=_HI), w3, precision=_HI)


def cached_gcn_matched_reference(features, adj, w1, w3):
    """f32 reference fed the same bf16-rounded operands as the kernels."""
    a = adj.astype(jnp.bfloat16).astype(jnp.float32)
    xw1 = jnp.dot(features, w1, precision=_HI).astype(jnp.bfloat16).astype(jnp.float32)
    h = jnp.maximum(jnp.dot(a, xw1, precision=_HI), 0.0)
    hw3 = jnp.dot(h, w3, precision=_HI).astype(jnp.bfloat16).astype(jnp.float32)
    return jnp.dot(a, hw3, precision=_HI)


if __name__ == "__main__":
    # Small shapes consistent with the module: N nodes, in_dim input features,
    # hidden_dim=16 (module default), out_dim = num_classes.
    N, in_dim, hidden_dim, out_dim = 256, 32, 16, 8

    key = jax.random.PRNGKey(0)
    k_feat, k_adj, k_w1, k_w2, k_w3 = jax.random.split(key, 5)

    features = jax.random.normal(k_feat, (N, in_dim), dtype=jnp.float32)

    # Dense "adjacency" (sum of the module's sparse adj_parts), row-normalized
    # like a typical GCN propagation matrix.
    adj_raw = (jax.random.uniform(k_adj, (N, N)) < 0.1).astype(jnp.float32)
    adj_raw = adj_raw + jnp.eye(N, dtype=jnp.float32)
    adj = adj_raw / jnp.sum(adj_raw, axis=1, keepdims=True)

    # torch.rand -> uniform [0, 1); deterministic synthetic init here.
    weight1 = jax.random.uniform(k_w1, (in_dim, hidden_dim), dtype=jnp.float32)
    weight2 = jax.random.uniform(k_w2, (hidden_dim, hidden_dim), dtype=jnp.float32)  # unused in forward
    weight3 = jax.random.uniform(k_w3, (hidden_dim, out_dim), dtype=jnp.float32)

    # Path 1: fused small-graph kernel (A resident in VMEM, read once).
    fwd_fused = jax.jit(functools.partial(cached_gcn_forward, use_fused=True))
    out_fused = jax.block_until_ready(fwd_fused(features, adj, weight1, weight3))

    # Path 2: general K-tiled streaming kernels (the large-graph path); small
    # tiles here purely to exercise a multi-tile grid with accumulation.
    fwd_tiled = jax.jit(functools.partial(cached_gcn_forward, use_fused=False,
                                          tm=128, tk=128))
    out_tiled = jax.block_until_ready(fwd_tiled(features, adj, weight1, weight3))

    ref_matched = cached_gcn_matched_reference(features, adj, weight1, weight3)
    ref_f32 = cached_gcn_reference(features, adj, weight1, weight3)

    assert out_fused.shape == (N, out_dim)
    assert out_tiled.shape == (N, out_dim)
    # Tight check against the f32 reference fed identical bf16-rounded inputs.
    assert jnp.allclose(out_fused, ref_matched, rtol=1e-2, atol=1e-2), \
        "fused kernel mismatch vs matched reference"
    assert jnp.allclose(out_tiled, ref_matched, rtol=1e-2, atol=1e-2), \
        "tiled kernel mismatch vs matched reference"
    # Looser check against the pure-f32 reference (bf16 adjacency/operands).
    assert jnp.allclose(out_fused, ref_f32, rtol=3e-2, atol=2e-1), \
        "fused kernel mismatch vs f32 reference"
    assert jnp.allclose(out_tiled, ref_f32, rtol=3e-2, atol=2e-1), \
        "tiled kernel mismatch vs f32 reference"

    print("KERNEL_OK")
</pallas_src>

<mosaic_0001>
module attributes {stable_mosaic.version = 11 : i64} {
  func.func @fused_small_kernel(%arg0: memref<256x256xbf16, #tpu.memory_space<vmem>>, %arg1: memref<256x16xbf16, #tpu.memory_space<vmem>>, %arg2: memref<16x8xf32, #tpu.memory_space<vmem>>, %arg3: memref<256x8xf32, #tpu.memory_space<vmem>>) attributes {dimension_semantics = [], scalar_prefetch = 0 : i64, scratch_operands = 0 : i64, tpu.core_type = #tpu.core_type<tc>} {
    %c0 = arith.constant 0 : index
    %c0_0 = arith.constant 0 : index
    %0 = vector.load %arg0[%c0, %c0_0] : memref<256x256xbf16, #tpu.memory_space<vmem>>, vector<256x256xbf16>
    %c0_1 = arith.constant 0 : index
    %c0_2 = arith.constant 0 : index
    %1 = vector.load %arg1[%c0_1, %c0_2] : memref<256x16xbf16, #tpu.memory_space<vmem>>, vector<256x16xbf16>
    %cst = arith.constant dense<0.000000e+00> : vector<256x16xf32>
    %2 = tpu.matmul %0, %1, %cst {dimension_numbers = #tpu.dot_dimension_numbers<[1], [0], [0], [1], [0, 0, 1, 1], [], []>} : vector<256x256xbf16>, vector<256x16xbf16>, vector<256x16xf32> -> vector<256x16xf32>
    %cst_3 = arith.constant 0.000000e+00 : f32
    %3 = vector.broadcast %cst_3 : f32 to vector<256x16xf32>
    %4 = arith.maximumf %2, %3 : vector<256x16xf32>
    %c0_4 = arith.constant 0 : index
    %c0_5 = arith.constant 0 : index
    %5 = vector.load %arg2[%c0_4, %c0_5] : memref<16x8xf32, #tpu.memory_space<vmem>>, vector<16x8xf32>
    %cst_6 = arith.constant dense<0.000000e+00> : vector<256x8xf32>
    %6 = tpu.matmul %4, %5, %cst_6 {dimension_numbers = #tpu.dot_dimension_numbers<[1], [0], [0], [1], [0, 0, 1, 1], [], []>} : vector<256x16xf32>, vector<16x8xf32>, vector<256x8xf32> -> vector<256x8xf32>
    %7 = arith.truncf %6 : vector<256x8xf32> to vector<256x8xbf16>
    %cst_7 = arith.constant dense<0.000000e+00> : vector<256x8xf32>
    %8 = tpu.matmul %0, %7, %cst_7 {dimension_numbers = #tpu.dot_dimension_numbers<[1], [0], [0], [1], [0, 0, 1, 1], [], []>} : vector<256x256xbf16>, vector<256x8xbf16>, vector<256x8xf32> -> vector<256x8xf32>
    %c0_8 = arith.constant 0 : index
    %c0_9 = arith.constant 0 : index
    %9 = vector.load %arg3[%c0_8, %c0_9] : memref<256x8xf32, #tpu.memory_space<vmem>>, vector<256x8xf32>
    tpu.vector_store %arg3[%c0_8, %c0_9], %8 {strides = array<i32>} : memref<256x8xf32, #tpu.memory_space<vmem>>, vector<256x8xf32>,
    return
  }
}

</mosaic_0001>

<llo_original>
// kernel: cached_gcn_forward.1
$region0: #{cached_gcn_forward.1}
  #allocation0 [shape = 'u32[]', space=smem, size = 0x4, offset = 0x4, fixed_abs, tag = 'smem constant byte address 0x4 - core index']
  #allocation1 [shape = 'u32[144,128]{1,0:T(1,128)}', space=vmem, size = 0x12000, scoped, tag = 'internal scratch']
  %s0 = inlined_call_operand.vmem [shape: bf16[256,256], index: 0, kind: input, shape index: {}]
  %s1 = inlined_call_operand.vmem [shape: bf16[256,16], index: 1, kind: input, shape index: {}]
  %s2 = inlined_call_operand.vmem [shape: f32[16,8], index: 2, kind: input, shape index: {}]
  %s3 = inlined_call_operand.vmem [shape: f32[256,8], index: 3, kind: output, shape index: {}]
  %s4 = sld [smem:[#allocation0]]
  $region22: #{cached_gcn_forward.1} parent=0
    _
  %s6 = ssub.s32 1, %s4
  %s7 = scalar_select 0, %s6, %s4
  // Predicated region
  $region2: #{cached_gcn_forward.1} parent=0 // pred_check
    _
  $region3: #{cached_gcn_forward.1} parent=0 // pred_check_branch
    %9 = sbr.rel (0) target = $region5
  $region4: #{cached_gcn_forward.1} parent=0 // pred_region
    _
  $region5: #{cached_gcn_forward.1} parent=0 // pred_fallthru
    _
  // Predicated region
  $region6: #{cached_gcn_forward.1} parent=0 // pred_check
    _
  $region7: #{cached_gcn_forward.1} parent=0 // pred_check_branch
    %11 = sbr.rel (0) target = $region9
  $region8: #{cached_gcn_forward.1} parent=0 // pred_region
    _
  $region9: #{cached_gcn_forward.1} parent=0 // pred_fallthru
    _
  // Predicated region
  $region10: #{cached_gcn_forward.1} parent=0 // pred_check
    _
  $region11: #{cached_gcn_forward.1} parent=0 // pred_check_branch
    %13 = sbr.rel (0) target = $region13
  $region12: #{cached_gcn_forward.1} parent=0 // pred_region
    _
  $region13: #{cached_gcn_forward.1} parent=0 // pred_fallthru
    _
  %v15 = vld [vmem:[%s0] sm:$0xff]
  %v16 = vld [vmem:[%s0 + $0x8] sm:$0xff]
  %v17 = vld [vmem:[%s0 + $0x10] sm:$0xff]
  %v18 = vld [vmem:[%s0 + $0x18] sm:$0xff]
  %v19 = vld [vmem:[%s0 + $0x20] sm:$0xff]
  %v20 = vld [vmem:[%s0 + $0x28] sm:$0xff]
  %v21 = vld [vmem:[%s0 + $0x30] sm:$0xff]
  %v22 = vld [vmem:[%s0 + $0x38] sm:$0xff]
  %v23 = vld [vmem:[%s0 + $0x40] sm:$0xff]
  %v24 = vld [vmem:[%s0 + $0x48] sm:$0xff]
  %v25 = vld [vmem:[%s0 + $0x50] sm:$0xff]
  %v26 = vld [vmem:[%s0 + $0x58] sm:$0xff]
  %v27 = vld [vmem:[%s0 + $0x60] sm:$0xff]
  %v28 = vld [vmem:[%s0 + $0x68] sm:$0xff]
  %v29 = vld [vmem:[%s0 + $0x70] sm:$0xff]
  %v30 = vld [vmem:[%s0 + $0x78] sm:$0xff]
  %v31 = vld [vmem:[%s0 + $0x80] sm:$0xff]
  %v32 = vld [vmem:[%s0 + $0x88] sm:$0xff]
  %v33 = vld [vmem:[%s0 + $0x90] sm:$0xff]
  %v34 = vld [vmem:[%s0 + $0x98] sm:$0xff]
  %v35 = vld [vmem:[%s0 + $0xa0] sm:$0xff]
  %v36 = vld [vmem:[%s0 + $0xa8] sm:$0xff]
  %v37 = vld [vmem:[%s0 + $0xb0] sm:$0xff]
  %v38 = vld [vmem:[%s0 + $0xb8] sm:$0xff]
  %v39 = vld [vmem:[%s0 + $0xc0] sm:$0xff]
  %v40 = vld [vmem:[%s0 + $0xc8] sm:$0xff]
  %v41 = vld [vmem:[%s0 + $0xd0] sm:$0xff]
  %v42 = vld [vmem:[%s0 + $0xd8] sm:$0xff]
  %v43 = vld [vmem:[%s0 + $0xe0] sm:$0xff]
  %v44 = vld [vmem:[%s0 + $0xe8] sm:$0xff]
  %v45 = vld [vmem:[%s0 + $0xf0] sm:$0xff]
  %v46 = vld [vmem:[%s0 + $0xf8] sm:$0xff]
  %v47 = vld [vmem:[%s1] sm:$0xf]
  %v48 = vld [vmem:[%s1 + $0x4] sm:$0xf]
  %v49 = vld [vmem:[%s1 + $0x8] sm:$0xf]
  %v50 = vld [vmem:[%s1 + $0xc] sm:$0xf]
  %v51 = vld [vmem:[%s1 + $0x10] sm:$0xf]
  %v52 = vld [vmem:[%s1 + $0x14] sm:$0xf]
  %v53 = vld [vmem:[%s1 + $0x18] sm:$0xf]
  %v54 = vld [vmem:[%s1 + $0x1c] sm:$0xf]
  %v55 = vld [vmem:[%s1 + $0x20] sm:$0xf]
  %v56 = vld [vmem:[%s1 + $0x24] sm:$0xf]
  %v57 = vld [vmem:[%s1 + $0x28] sm:$0xf]
  %v58 = vld [vmem:[%s1 + $0x2c] sm:$0xf]
  %v59 = vld [vmem:[%s1 + $0x30] sm:$0xf]
  %v60 = vld [vmem:[%s1 + $0x34] sm:$0xf]
  %v61 = vld [vmem:[%s1 + $0x38] sm:$0xf]
  %v62 = vld [vmem:[%s1 + $0x3c] sm:$0xf]
  %v63 = vld [vmem:[%s1 + $0x40] sm:$0xf]
  %v64 = vld [vmem:[%s1 + $0x44] sm:$0xf]
  %v65 = vld [vmem:[%s1 + $0x48] sm:$0xf]
  %v66 = vld [vmem:[%s1 + $0x4c] sm:$0xf]
  %v67 = vld [vmem:[%s1 + $0x50] sm:$0xf]
  %v68 = vld [vmem:[%s1 + $0x54] sm:$0xf]
  %v69 = vld [vmem:[%s1 + $0x58] sm:$0xf]
  %v70 = vld [vmem:[%s1 + $0x5c] sm:$0xf]
  %v71 = vld [vmem:[%s1 + $0x60] sm:$0xf]
  %v72 = vld [vmem:[%s1 + $0x64] sm:$0xf]
  %v73 = vld [vmem:[%s1 + $0x68] sm:$0xf]
  %v74 = vld [vmem:[%s1 + $0x6c] sm:$0xf]
  %v75 = vld [vmem:[%s1 + $0x70] sm:$0xf]
  %v76 = vld [vmem:[%s1 + $0x74] sm:$0xf]
  %v77 = vld [vmem:[%s1 + $0x78] sm:$0xf]
  %v78 = vld [vmem:[%s1 + $0x7c] sm:$0xf]
  %v111 = vunpack.c.l.b16 %v15
  %v112 = vunpack.c.h.b16 %v15
  %v113 = vunpack.c.l.b16 %v16
  %v114 = vunpack.c.h.b16 %v16
  %v115 = vunpack.c.l.b16 %v17
  %v116 = vunpack.c.h.b16 %v17
  %v117 = vunpack.c.l.b16 %v18
  %v118 = vunpack.c.h.b16 %v18
  %v119 = vunpack.c.l.b16 %v19
  %v120 = vunpack.c.h.b16 %v19
  %v121 = vunpack.c.l.b16 %v20
  %v122 = vunpack.c.h.b16 %v20
  %v123 = vunpack.c.l.b16 %v21
  %v124 = vunpack.c.h.b16 %v21
  %v125 = vunpack.c.l.b16 %v22
  %v126 = vunpack.c.h.b16 %v22
  %v127 = vunpack.c.l.b16 %v23
  %v128 = vunpack.c.h.b16 %v23
  %v129 = vunpack.c.l.b16 %v24
  %v130 = vunpack.c.h.b16 %v24
  %v131 = vunpack.c.l.b16 %v25
  %v132 = vunpack.c.h.b16 %v25
  %v133 = vunpack.c.l.b16 %v26
  %v134 = vunpack.c.h.b16 %v26
  %v135 = vunpack.c.l.b16 %v27
  %v136 = vunpack.c.h.b16 %v27
  %v137 = vunpack.c.l.b16 %v28
  %v138 = vunpack.c.h.b16 %v28
  %v139 = vunpack.c.l.b16 %v29
  %v140 = vunpack.c.h.b16 %v29
  %v141 = vunpack.c.l.b16 %v30
  %v142 = vunpack.c.h.b16 %v30
  %v143 = vunpack.c.l.b16 %v31
  %v144 = vunpack.c.h.b16 %v31
  %v145 = vunpack.c.l.b16 %v32
  %v146 = vunpack.c.h.b16 %v32
  %v147 = vunpack.c.l.b16 %v33
  %v148 = vunpack.c.h.b16 %v33
  %v149 = vunpack.c.l.b16 %v34
  %v150 = vunpack.c.h.b16 %v34
  %v151 = vunpack.c.l.b16 %v35
  %v152 = vunpack.c.h.b16 %v35
  %v153 = vunpack.c.l.b16 %v36
  %v154 = vunpack.c.h.b16 %v36
  %v155 = vunpack.c.l.b16 %v37
  %v156 = vunpack.c.h.b16 %v37
  %v157 = vunpack.c.l.b16 %v38
  %v158 = vunpack.c.h.b16 %v38
  %v159 = vunpack.c.l.b16 %v39
  %v160 = vunpack.c.h.b16 %v39
  %v161 = vunpack.c.l.b16 %v40
  %v162 = vunpack.c.h.b16 %v40
  %v163 = vunpack.c.l.b16 %v41
  %v164 = vunpack.c.h.b16 %v41
  %v165 = vunpack.c.l.b16 %v42
  %v166 = vunpack.c.h.b16 %v42
  %v167 = vunpack.c.l.b16 %v43
  %v168 = vunpack.c.h.b16 %v43
  %v169 = vunpack.c.l.b16 %v44
  %v170 = vunpack.c.h.b16 %v44
  %v171 = vunpack.c.l.b16 %v45
  %v172 = vunpack.c.h.b16 %v45
  %v173 = vunpack.c.l.b16 %v46
  %v174 = vunpack.c.h.b16 %v46
  %v175 = vpack.c.b16 %v113, %v111
  %v176 = vpack.c.b16 %v114, %v112
  %v177 = vpack.c.b16 %v117, %v115
  %v178 = vpack.c.b16 %v118, %v116
  %v179 = vpack.c.b16 %v121, %v119
  %v180 = vpack.c.b16 %v122, %v120
  %v181 = vpack.c.b16 %v125, %v123
  %v182 = vpack.c.b16 %v126, %v124
  %v183 = vpack.c.b16 %v129, %v127
  %v184 = vpack.c.b16 %v130, %v128
  %v185 = vpack.c.b16 %v133, %v131
  %v186 = vpack.c.b16 %v134, %v132
  %v187 = vpack.c.b16 %v137, %v135
  %v188 = vpack.c.b16 %v138, %v136
  %v189 = vpack.c.b16 %v141, %v139
  %v190 = vpack.c.b16 %v142, %v140
  %v191 = vpack.c.b16 %v145, %v143
  %v192 = vpack.c.b16 %v146, %v144
  %v193 = vpack.c.b16 %v149, %v147
  %v194 = vpack.c.b16 %v150, %v148
  %v195 = vpack.c.b16 %v153, %v151
  %v196 = vpack.c.b16 %v154, %v152
  %v197 = vpack.c.b16 %v157, %v155
  %v198 = vpack.c.b16 %v158, %v156
  %v199 = vpack.c.b16 %v161, %v159
  %v200 = vpack.c.b16 %v162, %v160
  %v201 = vpack.c.b16 %v165, %v163
  %v202 = vpack.c.b16 %v166, %v164
  %v203 = vpack.c.b16 %v169, %v167
  %v204 = vpack.c.b16 %v170, %v168
  %v205 = vpack.c.b16 %v173, %v171
  %v206 = vpack.c.b16 %v174, %v172
  %v271 = vunpack.c.l.b16 %v47
  %v272 = vunpack.c.l.b16 %v48
  %v273 = vunpack.c.l.b16 %v49
  %v274 = vunpack.c.l.b16 %v50
  %v275 = vunpack.c.l.b16 %v51
  %v276 = vunpack.c.l.b16 %v52
  %v277 = vunpack.c.l.b16 %v53
  %v278 = vunpack.c.l.b16 %v54
  %v279 = vunpack.c.l.b16 %v55
  %v280 = vunpack.c.l.b16 %v56
  %v281 = vunpack.c.l.b16 %v57
  %v282 = vunpack.c.l.b16 %v58
  %v283 = vunpack.c.l.b16 %v59
  %v284 = vunpack.c.l.b16 %v60
  %v285 = vunpack.c.l.b16 %v61
  %v286 = vunpack.c.l.b16 %v62
  %v287 = vunpack.c.l.b16 %v63
  %v288 = vunpack.c.l.b16 %v64
  %v289 = vunpack.c.l.b16 %v65
  %v290 = vunpack.c.l.b16 %v66
  %v291 = vunpack.c.l.b16 %v67
  %v292 = vunpack.c.l.b16 %v68
  %v293 = vunpack.c.l.b16 %v69
  %v294 = vunpack.c.l.b16 %v70
  %v295 = vunpack.c.l.b16 %v71
  %v296 = vunpack.c.l.b16 %v72
  %v297 = vunpack.c.l.b16 %v73
  %v298 = vunpack.c.l.b16 %v74
  %v299 = vunpack.c.l.b16 %v75
  %v300 = vunpack.c.l.b16 %v76
  %v301 = vunpack.c.l.b16 %v77
  %v302 = vunpack.c.l.b16 %v78
  %v303 = vpack.c.b16 %v272, %v271
  %v304 = vpack.c.b16 %v274, %v273
  %v305 = vpack.c.b16 %v276, %v275
  %v306 = vpack.c.b16 %v278, %v277
  %v307 = vpack.c.b16 %v280, %v279
  %v308 = vpack.c.b16 %v282, %v281
  %v309 = vpack.c.b16 %v284, %v283
  %v310 = vpack.c.b16 %v286, %v285
  %v311 = vpack.c.b16 %v288, %v287
  %v312 = vpack.c.b16 %v290, %v289
  %v313 = vpack.c.b16 %v292, %v291
  %v314 = vpack.c.b16 %v294, %v293
  %v315 = vpack.c.b16 %v296, %v295
  %v316 = vpack.c.b16 %v298, %v297
  %v317 = vpack.c.b16 %v300, %v299
  %v318 = vpack.c.b16 %v302, %v301
  %335 = vmatprep.subr.bf16.mxu0 0
  %336 = vmatpush1.bf16.msra.mxu0 %v303
  %337 = vmatprep.subr.bf16.mxu0 0
  %338 = vmatpush1.bf16.msra.mxu0 %v304
  %339 = vmatprep.subr.bf16.mxu0 0
  %340 = vmatpush1.bf16.msra.mxu0 %v305
  %341 = vmatprep.subr.bf16.mxu0 0
  %342 = vmatpush1.bf16.msra.mxu0 %v306
  %343 = vmatprep.subr.bf16.mxu0 0
  %344 = vmatpush1.bf16.msra.mxu0 %v307
  %345 = vmatprep.subr.bf16.mxu0 0
  %346 = vmatpush1.bf16.msra.mxu0 %v308
  %347 = vmatprep.subr.bf16.mxu0 0
  %348 = vmatpush1.bf16.msra.mxu0 %v309
  %349 = vmatprep.subr.bf16.mxu0 0
  %350 = vmatpush1.bf16.msra.mxu0 %v310
  %351 = vmatprep.subr.bf16.mxu0 0
  %352 = vmatpush1.bf16.msra.mxu0 %v311
  %353 = vmatprep.subr.bf16.mxu0 0
  %354 = vmatpush1.bf16.msra.mxu0 %v312
  %355 = vmatprep.subr.bf16.mxu0 0
  %356 = vmatpush1.bf16.msra.mxu0 %v313
  %357 = vmatprep.subr.bf16.mxu0 0
  %358 = vmatpush1.bf16.msra.mxu0 %v314
  %359 = vmatprep.subr.bf16.mxu0 0
  %360 = vmatpush1.bf16.msra.mxu0 %v315
  %361 = vmatprep.subr.bf16.mxu0 0
  %362 = vmatpush1.bf16.msra.mxu0 %v316
  %363 = vmatprep.subr.bf16.mxu0 0
  %364 = vmatpush1.bf16.msra.mxu0 %v317
  %365 = vmatprep.subr.bf16.mxu0 0
  %366 = vmatpush1.bf16.msra.mxu0 %v318
  %367 = vmatprep.mubr.bf16.mxu0 %v176
  %368 = vmatmul.mubr.bf16.gmra.mrb[0].mxu0 %v175
  %v369 = vpop.f32.mrb[0].mxu0
  %v370 = vadd.f32 0.0, %v369
  %v371 = vpop.f32.mrb[0].mxu0
  %v372 = vpop.f32.mrb[0].mxu0
  %v373 = vadd.f32 0.0, %v372
  %v374 = vpop.f32.mrb[0].mxu0
  %375 = vmatprep.mubr.bf16.mxu0 %v178
  %376 = vmatmul.mubr.bf16.gmra.mrb[0].mxu0 %v177
  %v377 = vpop.f32.mrb[0].mxu0
  %v378 = vadd.f32 0.0, %v377
  %v379 = vpop.f32.mrb[0].mxu0
  %v380 = vpop.f32.mrb[0].mxu0
  %v381 = vadd.f32 0.0, %v380
  %v382 = vpop.f32.mrb[0].mxu0
  %383 = vmatprep.mubr.bf16.mxu0 %v180
  %384 = vmatmul.mubr.bf16.gmra.mrb[0].mxu0 %v179
  %v385 = vpop.f32.mrb[0].mxu0
  %v386 = vadd.f32 0.0, %v385
  %v387 = vpop.f32.mrb[0].mxu0
  %v388 = vpop.f32.mrb[0].mxu0
  %v389 = vadd.f32 0.0, %v388
  %v390 = vpop.f32.mrb[0].mxu0
  %391 = vmatprep.mubr.bf16.mxu0 %v182
  %392 = vmatmul.mubr.bf16.gmra.mrb[0].mxu0 %v181
  %v393 = vpop.f32.mrb[0].mxu0
  %v394 = vadd.f32 0.0, %v393
  %v395 = vpop.f32.mrb[0].mxu0
  %v396 = vpop.f32.mrb[0].mxu0
  %v397 = vadd.f32 0.0, %v396
  %v398 = vpop.f32.mrb[0].mxu0
  %399 = vmatprep.mubr.bf16.mxu0 %v184
  %400 = vmatmul.mubr.bf16.gmra.mrb[0].mxu0 %v183
  %v401 = vpop.f32.mrb[0].mxu0
  %v402 = vadd.f32 0.0, %v401
  %v403 = vpop.f32.mrb[0].mxu0
  %v404 = vpop.f32.mrb[0].mxu0
  %v405 = vadd.f32 0.0, %v404
  %v406 = vpop.f32.mrb[0].mxu0
  %407 = vmatprep.mubr.bf16.mxu0 %v186
  %408 = vmatmul.mubr.bf16.gmra.mrb[0].mxu0 %v185
  %v409 = vpop.f32.mrb[0].mxu0
  %v410 = vadd.f32 0.0, %v409
  %v411 = vpop.f32.mrb[0].mxu0
  %v412 = vpop.f32.mrb[0].mxu0
  %v413 = vadd.f32 0.0, %v412
  %v414 = vpop.f32.mrb[0].mxu0
  %415 = vmatprep.mubr.bf16.mxu0 %v188
  %416 = vmatmul.mubr.bf16.gmra.mrb[0].mxu0 %v187
  %v417 = vpop.f32.mrb[0].mxu0
  %v418 = vadd.f32 0.0, %v417
  %v419 = vpop.f32.mrb[0].mxu0
  %v420 = vpop.f32.mrb[0].mxu0
  %v421 = vadd.f32 0.0, %v420
  %v422 = vpop.f32.mrb[0].mxu0
  %423 = vmatprep.mubr.bf16.mxu0 %v190
  %424 = vmatmul.mubr.bf16.gmra.mrb[0].mxu0 %v189
  %v425 = vpop.f32.mrb[0].mxu0
  %v426 = vadd.f32 0.0, %v425
  %v427 = vpop.f32.mrb[0].mxu0
  %v428 = vpop.f32.mrb[0].mxu0
  %v429 = vadd.f32 0.0, %v428
  %v430 = vpop.f32.mrb[0].mxu0
  %431 = vmatprep.mubr.bf16.mxu0 %v192
  %432 = vmatmul.mubr.bf16.gmra.mrb[0].mxu0 %v191
  %v433 = vpop.f32.mrb[0].mxu0
  %v434 = vadd.f32 0.0, %v433
  %v435 = vpop.f32.mrb[0].mxu0
  %v436 = vpop.f32.mrb[0].mxu0
  %v437 = vadd.f32 0.0, %v436
  %v438 = vpop.f32.mrb[0].mxu0
  %439 = vmatprep.mubr.bf16.mxu0 %v194
  %440 = vmatmul.mubr.bf16.gmra.mrb[0].mxu0 %v193
  %v441 = vpop.f32.mrb[0].mxu0
  %v442 = vadd.f32 0.0, %v441
  %v443 = vpop.f32.mrb[0].mxu0
  %v444 = vpop.f32.mrb[0].mxu0
  %v445 = vadd.f32 0.0, %v444
  %v446 = vpop.f32.mrb[0].mxu0
  %447 = vmatprep.mubr.bf16.mxu0 %v196
  %448 = vmatmul.mubr.bf16.gmra.mrb[0].mxu0 %v195
  %v449 = vpop.f32.mrb[0].mxu0
  %v450 = vadd.f32 0.0, %v449
  %v451 = vpop.f32.mrb[0].mxu0
  %v452 = vpop.f32.mrb[0].mxu0
  %v453 = vadd.f32 0.0, %v452
  %v454 = vpop.f32.mrb[0].mxu0
  %455 = vmatprep.mubr.bf16.mxu0 %v198
  %456 = vmatmul.mubr.bf16.gmra.mrb[0].mxu0 %v197
  %v457 = vpop.f32.mrb[0].mxu0
  %v458 = vadd.f32 0.0, %v457
  %v459 = vpop.f32.mrb[0].mxu0
  %v460 = vpop.f32.mrb[0].mxu0
  %v461 = vadd.f32 0.0, %v460
  %v462 = vpop.f32.mrb[0].mxu0
  %463 = vmatprep.mubr.bf16.mxu0 %v200
  %464 = vmatmul.mubr.bf16.gmra.mrb[0].mxu0 %v199
  %v465 = vpop.f32.mrb[0].mxu0
  %v466 = vadd.f32 0.0, %v465
  %v467 = vpop.f32.mrb[0].mxu0
  %v468 = vpop.f32.mrb[0].mxu0
  %v469 = vadd.f32 0.0, %v468
  %v470 = vpop.f32.mrb[0].mxu0
  %471 = vmatprep.mubr.bf16.mxu0 %v202
  %472 = vmatmul.mubr.bf16.gmra.mrb[0].mxu0 %v201
  %v473 = vpop.f32.mrb[0].mxu0
  %v474 = vadd.f32 0.0, %v473
  %v475 = vpop.f32.mrb[0].mxu0
  %v476 = vpop.f32.mrb[0].mxu0
  %v477 = vadd.f32 0.0, %v476
  %v478 = vpop.f32.mrb[0].mxu0
  %479 = vmatprep.mubr.bf16.mxu0 %v204
  %480 = vmatmul.mubr.bf16.gmra.mrb[0].mxu0 %v203
  %v481 = vpop.f32.mrb[0].mxu0
  %v482 = vadd.f32 0.0, %v481
  %v483 = vpop.f32.mrb[0].mxu0
  %v484 = vpop.f32.mrb[0].mxu0
  %v485 = vadd.f32 0.0, %v484
  %v486 = vpop.f32.mrb[0].mxu0
  %487 = vmatprep.mubr.bf16.mxu0 %v206
  %488 = vmatmul.mubr.bf16.gmra.mrb[0].mxu0 %v205
  %v489 = vpop.f32.mrb[0].mxu0
  %v490 = vadd.f32 0.0, %v489
  %v491 = vpop.f32.mrb[0].mxu0
  %v492 = vpop.f32.mrb[0].mxu0
  %v493 = vadd.f32 0.0, %v492
  %v494 = vpop.f32.mrb[0].mxu0
  %495 = vdwg.mxu0
  %v496 = vmax.f32 %v370, 0.0
  %v497 = vmax.f32 %v373, 0.0
  %v498 = vmax.f32 %v378, 0.0
  %v499 = vmax.f32 %v381, 0.0
  %v500 = vmax.f32 %v386, 0.0
  %v501 = vmax.f32 %v389, 0.0
  %v502 = vmax.f32 %v394, 0.0
  %v503 = vmax.f32 %v397, 0.0
  %v504 = vmax.f32 %v402, 0.0
  %v505 = vmax.f32 %v405, 0.0
  %v506 = vmax.f32 %v410, 0.0
  %v507 = vmax.f32 %v413, 0.0
  %v508 = vmax.f32 %v418, 0.0
  %v509 = vmax.f32 %v421, 0.0
  %v510 = vmax.f32 %v426, 0.0
  %v511 = vmax.f32 %v429, 0.0
  %v512 = vmax.f32 %v434, 0.0
  %v513 = vmax.f32 %v437, 0.0
  %v514 = vmax.f32 %v442, 0.0
  %v515 = vmax.f32 %v445, 0.0
  %v516 = vmax.f32 %v450, 0.0
  %v517 = vmax.f32 %v453, 0.0
  %v518 = vmax.f32 %v458, 0.0
  %v519 = vmax.f32 %v461, 0.0
  %v520 = vmax.f32 %v466, 0.0
  %v521 = vmax.f32 %v469, 0.0
  %v522 = vmax.f32 %v474, 0.0
  %v523 = vmax.f32 %v477, 0.0
  %v524 = vmax.f32 %v482, 0.0
  %v525 = vmax.f32 %v485, 0.0
  %v526 = vmax.f32 %v490, 0.0
  %v527 = vmax.f32 %v493, 0.0
  %v528 = vld [vmem:[%s2] sm:$0xff]
  %v529 = vld [vmem:[%s2 + $0x8] sm:$0xff]
  %vm530 = vcmask 130048
  %v532 = vsel %vm530, %v496, 0
  %v535 = vsel %vm530, %v497, 0
  %v538 = vsel %vm530, %v498, 0
  %v541 = vsel %vm530, %v499, 0
  %v544 = vsel %vm530, %v500, 0
  %v547 = vsel %vm530, %v501, 0
  %v550 = vsel %vm530, %v502, 0
  %v553 = vsel %vm530, %v503, 0
  %v556 = vsel %vm530, %v504, 0
  %v559 = vsel %vm530, %v505, 0
  %v562 = vsel %vm530, %v506, 0
  %v565 = vsel %vm530, %v507, 0
  %v568 = vsel %vm530, %v508, 0
  %v571 = vsel %vm530, %v509, 0
  %v574 = vsel %vm530, %v510, 0
  %v577 = vsel %vm530, %v511, 0
  %v580 = vsel %vm530, %v512, 0
  %v583 = vsel %vm530, %v513, 0
  %v586 = vsel %vm530, %v514, 0
  %v589 = vsel %vm530, %v515, 0
  %v592 = vsel %vm530, %v516, 0
  %v595 = vsel %vm530, %v517, 0
  %v598 = vsel %vm530, %v518, 0
  %v601 = vsel %vm530, %v519, 0
  %v604 = vsel %vm530, %v520, 0
  %v607 = vsel %vm530, %v521, 0
  %v610 = vsel %vm530, %v522, 0
  %v613 = vsel %vm530, %v523, 0
  %v616 = vsel %vm530, %v524, 0
  %v619 = vsel %vm530, %v525, 0
  %v622 = vsel %vm530, %v526, 0
  %v625 = vsel %vm530, %v527, 0
  %627 = vmatprep.subr.mxu0 0.0
  %628 = vmatpush1.msra.mxu0 %v528
  %629 = vmatprep.subr.mxu0 0.0
  %630 = vmatpush1.msra.mxu0 %v529
  %631 = vmatprep.subr.mxu0 0.0
  %632 = vmatpush1.msra.mxu0 0.0
  %633 = vmatprep.subr.mxu0 0.0
  %634 = vmatpush1.msra.mxu0 0.0
  %635 = vmatprep.subr.mxu0 0.0
  %636 = vmatpush1.msra.mxu0 0.0
  %637 = vmatprep.subr.mxu0 0.0
  %638 = vmatpush1.msra.mxu0 0.0
  %639 = vmatprep.subr.mxu0 0.0
  %640 = vmatpush1.msra.mxu0 0.0
  %641 = vmatprep.subr.mxu0 0.0
  %642 = vmatpush1.msra.mxu0 0.0
  %643 = vmatprep.subr.mxu0 0.0
  %644 = vmatpush1.msra.mxu0 0.0
  %645 = vmatprep.subr.mxu0 0.0
  %646 = vmatpush1.msra.mxu0 0.0
  %647 = vmatprep.subr.mxu0 0.0
  %648 = vmatpush1.msra.mxu0 0.0
  %649 = vmatprep.subr.mxu0 0.0
  %650 = vmatpush1.msra.mxu0 0.0
  %651 = vmatprep.subr.mxu0 0.0
  %652 = vmatpush1.msra.mxu0 0.0
  %653 = vmatprep.subr.mxu0 0.0
  %654 = vmatpush1.msra.mxu0 0.0
  %655 = vmatprep.subr.mxu0 0.0
  %656 = vmatpush1.msra.mxu0 0.0
  %657 = vmatprep.subr.mxu0 0.0
  %658 = vmatpush1.msra.mxu0 0.0
  %659 = vmatprep.subr.mxu0 0.0
  %660 = vmatpush1.msra.mxu0 0.0
  %661 = vmatprep.subr.mxu0 0.0
  %662 = vmatpush1.msra.mxu0 0.0
  %663 = vmatprep.subr.mxu0 0.0
  %664 = vmatpush1.msra.mxu0 0.0
  %665 = vmatprep.subr.mxu0 0.0
  %666 = vmatpush1.msra.mxu0 0.0
  %667 = vmatprep.subr.mxu0 0.0
  %668 = vmatpush1.msra.mxu0 0.0
  %669 = vmatprep.subr.mxu0 0.0
  %670 = vmatpush1.msra.mxu0 0.0
  %671 = vmatprep.subr.mxu0 0.0
  %672 = vmatpush1.msra.mxu0 0.0
  %673 = vmatprep.subr.mxu0 0.0
  %674 = vmatpush1.msra.mxu0 0.0
  %675 = vmatprep.subr.mxu0 0.0
  %676 = vmatpush1.msra.mxu0 0.0
  %677 = vmatprep.subr.mxu0 0.0
  %678 = vmatpush1.msra.mxu0 0.0
  %679 = vmatprep.subr.mxu0 0.0
  %680 = vmatpush1.msra.mxu0 0.0
  %681 = vmatprep.subr.mxu0 0.0
  %682 = vmatpush1.msra.mxu0 0.0
  %683 = vmatprep.subr.mxu0 0.0
  %684 = vmatpush1.msra.mxu0 0.0
  %685 = vmatprep.subr.mxu0 0.0
  %686 = vmatpush1.msra.mxu0 0.0
  %687 = vmatprep.subr.mxu0 0.0
  %688 = vmatpush1.msra.mxu0 0.0
  %689 = vmatprep.subr.mxu0 0.0
  %690 = vmatpush1.msra.mxu0 0.0
  %691 = vmatprep.mubr.f32.mxu0 0.0
  %692 = vmatmul.mubr.f32.gmra.mrb[0].mxu0 %v532
  %v693 = vpop.f32.mrb[0].mxu0
  %v694 = vadd.f32 0.0, %v693
  %v695 = vpop.f32.mrb[0].mxu0
  %696 = vmatprep.mubr.f32.mxu0 0.0
  %697 = vmatmul.mubr.f32.gmra.mrb[0].mxu0 %v535
  %v698 = vpop.f32.mrb[0].mxu0
  %v699 = vadd.f32 0.0, %v698
  %v700 = vpop.f32.mrb[0].mxu0
  %701 = vmatprep.mubr.f32.mxu0 0.0
  %702 = vmatmul.mubr.f32.gmra.mrb[0].mxu0 %v538
  %v703 = vpop.f32.mrb[0].mxu0
  %v704 = vadd.f32 0.0, %v703
  %v705 = vpop.f32.mrb[0].mxu0
  %706 = vmatprep.mubr.f32.mxu0 0.0
  %707 = vmatmul.mubr.f32.gmra.mrb[0].mxu0 %v541
  %v708 = vpop.f32.mrb[0].mxu0
  %v709 = vadd.f32 0.0, %v708
  %v710 = vpop.f32.mrb[0].mxu0
  %711 = vmatprep.mubr.f32.mxu0 0.0
  %712 = vmatmul.mubr.f32.gmra.mrb[0].mxu0 %v544
  %v713 = vpop.f32.mrb[0].mxu0
  %v714 = vadd.f32 0.0, %v713
  %v715 = vpop.f32.mrb[0].mxu0
  %716 = vmatprep.mubr.f32.mxu0 0.0
  %717 = vmatmul.mubr.f32.gmra.mrb[0].mxu0 %v547
  %v718 = vpop.f32.mrb[0].mxu0
  %v719 = vadd.f32 0.0, %v718
  %v720 = vpop.f32.mrb[0].mxu0
  %721 = vmatprep.mubr.f32.mxu0 0.0
  %722 = vmatmul.mubr.f32.gmra.mrb[0].mxu0 %v550
  %v723 = vpop.f32.mrb[0].mxu0
  %v724 = vadd.f32 0.0, %v723
  %v725 = vpop.f32.mrb[0].mxu0
  %726 = vmatprep.mubr.f32.mxu0 0.0
  %727 = vmatmul.mubr.f32.gmra.mrb[0].mxu0 %v553
  %v728 = vpop.f32.mrb[0].mxu0
  %v729 = vadd.f32 0.0, %v728
  %v730 = vpop.f32.mrb[0].mxu0
  %731 = vmatprep.mubr.f32.mxu0 0.0
  %732 = vmatmul.mubr.f32.gmra.mrb[0].mxu0 %v556
  %v733 = vpop.f32.mrb[0].mxu0
  %v734 = vadd.f32 0.0, %v733
  %v735 = vpop.f32.mrb[0].mxu0
  %736 = vmatprep.mubr.f32.mxu0 0.0
  %737 = vmatmul.mubr.f32.gmra.mrb[0].mxu0 %v559
  %v738 = vpop.f32.mrb[0].mxu0
  %v739 = vadd.f32 0.0, %v738
  %v740 = vpop.f32.mrb[0].mxu0
  %741 = vmatprep.mubr.f32.mxu0 0.0
  %742 = vmatmul.mubr.f32.gmra.mrb[0].mxu0 %v562
  %v743 = vpop.f32.mrb[0].mxu0
  %v744 = vadd.f32 0.0, %v743
  %v745 = vpop.f32.mrb[0].mxu0
  %746 = vmatprep.mubr.f32.mxu0 0.0
  %747 = vmatmul.mubr.f32.gmra.mrb[0].mxu0 %v565
  %v748 = vpop.f32.mrb[0].mxu0
  %v749 = vadd.f32 0.0, %v748
  %v750 = vpop.f32.mrb[0].mxu0
  %751 = vmatprep.mubr.f32.mxu0 0.0
  %752 = vmatmul.mubr.f32.gmra.mrb[0].mxu0 %v568
  %v753 = vpop.f32.mrb[0].mxu0
  %v754 = vadd.f32 0.0, %v753
  %v755 = vpop.f32.mrb[0].mxu0
  %756 = vmatprep.mubr.f32.mxu0 0.0
  %757 = vmatmul.mubr.f32.gmra.mrb[0].mxu0 %v571
  %v758 = vpop.f32.mrb[0].mxu0
  %v759 = vadd.f32 0.0, %v758
  %v760 = vpop.f32.mrb[0].mxu0
  %761 = vmatprep.mubr.f32.mxu0 0.0
  %762 = vmatmul.mubr.f32.gmra.mrb[0].mxu0 %v574
  %v763 = vpop.f32.mrb[0].mxu0
  %v764 = vadd.f32 0.0, %v763
  %v765 = vpop.f32.mrb[0].mxu0
  %766 = vmatprep.mubr.f32.mxu0 0.0
  %767 = vmatmul.mubr.f32.gmra.mrb[0].mxu0 %v577
  %v768 = vpop.f32.mrb[0].mxu0
  %v769 = vadd.f32 0.0, %v768
  %v770 = vpop.f32.mrb[0].mxu0
  %771 = vmatprep.mubr.f32.mxu0 0.0
  %772 = vmatmul.mubr.f32.gmra.mrb[0].mxu0 %v580
  %v773 = vpop.f32.mrb[0].mxu0
  %v774 = vadd.f32 0.0, %v773
  %v775 = vpop.f32.mrb[0].mxu0
  %776 = vmatprep.mubr.f32.mxu0 0.0
  %777 = vmatmul.mubr.f32.gmra.mrb[0].mxu0 %v583
  %v778 = vpop.f32.mrb[0].mxu0
  %v779 = vadd.f32 0.0, %v778
  %v780 = vpop.f32.mrb[0].mxu0
  %781 = vmatprep.mubr.f32.mxu0 0.0
  %782 = vmatmul.mubr.f32.gmra.mrb[0].mxu0 %v586
  %v783 = vpop.f32.mrb[0].mxu0
  %v784 = vadd.f32 0.0, %v783
  %v785 = vpop.f32.mrb[0].mxu0
  %786 = vmatprep.mubr.f32.mxu0 0.0
  %787 = vmatmul.mubr.f32.gmra.mrb[0].mxu0 %v589
  %v788 = vpop.f32.mrb[0].mxu0
  %v789 = vadd.f32 0.0, %v788
  %v790 = vpop.f32.mrb[0].mxu0
  %791 = vmatprep.mubr.f32.mxu0 0.0
  %792 = vmatmul.mubr.f32.gmra.mrb[0].mxu0 %v592
  %v793 = vpop.f32.mrb[0].mxu0
  %v794 = vadd.f32 0.0, %v793
  %v795 = vpop.f32.mrb[0].mxu0
  %796 = vmatprep.mubr.f32.mxu0 0.0
  %797 = vmatmul.mubr.f32.gmra.mrb[0].mxu0 %v595
  %v798 = vpop.f32.mrb[0].mxu0
  %v799 = vadd.f32 0.0, %v798
  %v800 = vpop.f32.mrb[0].mxu0
  %801 = vmatprep.mubr.f32.mxu0 0.0
  %802 = vmatmul.mubr.f32.gmra.mrb[0].mxu0 %v598
  %v803 = vpop.f32.mrb[0].mxu0
  %v804 = vadd.f32 0.0, %v803
  %v805 = vpop.f32.mrb[0].mxu0
  %806 = vmatprep.mubr.f32.mxu0 0.0
  %807 = vmatmul.mubr.f32.gmra.mrb[0].mxu0 %v601
  %v808 = vpop.f32.mrb[0].mxu0
  %v809 = vadd.f32 0.0, %v808
  %v810 = vpop.f32.mrb[0].mxu0
  %811 = vmatprep.mubr.f32.mxu0 0.0
  %812 = vmatmul.mubr.f32.gmra.mrb[0].mxu0 %v604
  %v813 = vpop.f32.mrb[0].mxu0
  %v814 = vadd.f32 0.0, %v813
  %v815 = vpop.f32.mrb[0].mxu0
  %816 = vmatprep.mubr.f32.mxu0 0.0
  %817 = vmatmul.mubr.f32.gmra.mrb[0].mxu0 %v607
  %v818 = vpop.f32.mrb[0].mxu0
  %v819 = vadd.f32 0.0, %v818
  %v820 = vpop.f32.mrb[0].mxu0
  %821 = vmatprep.mubr.f32.mxu0 0.0
  %822 = vmatmul.mubr.f32.gmra.mrb[0].mxu0 %v610
  %v823 = vpop.f32.mrb[0].mxu0
  %v824 = vadd.f32 0.0, %v823
  %v825 = vpop.f32.mrb[0].mxu0
  %826 = vmatprep.mubr.f32.mxu0 0.0
  %827 = vmatmul.mubr.f32.gmra.mrb[0].mxu0 %v613
  %v828 = vpop.f32.mrb[0].mxu0
  %v829 = vadd.f32 0.0, %v828
  %v830 = vpop.f32.mrb[0].mxu0
  %831 = vmatprep.mubr.f32.mxu0 0.0
  %832 = vmatmul.mubr.f32.gmra.mrb[0].mxu0 %v616
  %v833 = vpop.f32.mrb[0].mxu0
  %v834 = vadd.f32 0.0, %v833
  %v835 = vpop.f32.mrb[0].mxu0
  %836 = vmatprep.mubr.f32.mxu0 0.0
  %837 = vmatmul.mubr.f32.gmra.mrb[0].mxu0 %v619
  %v838 = vpop.f32.mrb[0].mxu0
  %v839 = vadd.f32 0.0, %v838
  %v840 = vpop.f32.mrb[0].mxu0
  %841 = vmatprep.mubr.f32.mxu0 0.0
  %842 = vmatmul.mubr.f32.gmra.mrb[0].mxu0 %v622
  %v843 = vpop.f32.mrb[0].mxu0
  %v844 = vadd.f32 0.0, %v843
  %v845 = vpop.f32.mrb[0].mxu0
  %846 = vmatprep.mubr.f32.mxu0 0.0
  %847 = vmatmul.mubr.f32.gmra.mrb[0].mxu0 %v625
  %v848 = vpop.f32.mrb[0].mxu0
  %v849 = vadd.f32 0.0, %v848
  %v850 = vpop.f32.mrb[0].mxu0
  %851 = vdwg.mxu0
  %v852 = vpack.c.bf16 %v699, %v694
  %v853 = vpack.c.bf16 %v709, %v704
  %v854 = vpack.c.bf16 %v719, %v714
  %v855 = vpack.c.bf16 %v729, %v724
  %v856 = vpack.c.bf16 %v739, %v734
  %v857 = vpack.c.bf16 %v749, %v744
  %v858 = vpack.c.bf16 %v759, %v754
  %v859 = vpack.c.bf16 %v769, %v764
  %v860 = vpack.c.bf16 %v779, %v774
  %v861 = vpack.c.bf16 %v789, %v784
  %v862 = vpack.c.bf16 %v799, %v794
  %v863 = vpack.c.bf16 %v809, %v804
  %v864 = vpack.c.bf16 %v819, %v814
  %v865 = vpack.c.bf16 %v829, %v824
  %v866 = vpack.c.bf16 %v839, %v834
  %v867 = vpack.c.bf16 %v849, %v844
  %868 = vmatprep.subr.bf16.mxu0 0
  %869 = vmatpush1.bf16.msra.mxu0 %v852
  %870 = vmatprep.subr.bf16.mxu0 0
  %871 = vmatpush1.bf16.msra.mxu0 %v853
  %872 = vmatprep.subr.bf16.mxu0 0
  %873 = vmatpush1.bf16.msra.mxu0 %v854
  %874 = vmatprep.subr.bf16.mxu0 0
  %875 = vmatpush1.bf16.msra.mxu0 %v855
  %876 = vmatprep.subr.bf16.mxu0 0
  %877 = vmatpush1.bf16.msra.mxu0 %v856
  %878 = vmatprep.subr.bf16.mxu0 0
  %879 = vmatpush1.bf16.msra.mxu0 %v857
  %880 = vmatprep.subr.bf16.mxu0 0
  %881 = vmatpush1.bf16.msra.mxu0 %v858
  %882 = vmatprep.subr.bf16.mxu0 0
  %883 = vmatpush1.bf16.msra.mxu0 %v859
  %884 = vmatprep.subr.bf16.mxu0 0
  %885 = vmatpush1.bf16.msra.mxu0 %v860
  %886 = vmatprep.subr.bf16.mxu0 0
  %887 = vmatpush1.bf16.msra.mxu0 %v861
  %888 = vmatprep.subr.bf16.mxu0 0
  %889 = vmatpush1.bf16.msra.mxu0 %v862
  %890 = vmatprep.subr.bf16.mxu0 0
  %891 = vmatpush1.bf16.msra.mxu0 %v863
  %892 = vmatprep.subr.bf16.mxu0 0
  %893 = vmatpush1.bf16.msra.mxu0 %v864
  %894 = vmatprep.subr.bf16.mxu0 0
  %895 = vmatpush1.bf16.msra.mxu0 %v865
  %896 = vmatprep.subr.bf16.mxu0 0
  %897 = vmatpush1.bf16.msra.mxu0 %v866
  %898 = vmatprep.subr.bf16.mxu0 0
  %899 = vmatpush1.bf16.msra.mxu0 %v867
  %900 = vmatprep.mubr.bf16.mxu0 %v176
  %901 = vmatmul.mubr.bf16.gmra.mrb[0].mxu0 %v175
  %v902 = vpop.f32.mrb[0].mxu0
  %v903 = vadd.f32 0.0, %v902
  %v904 = vpop.f32.mrb[0].mxu0
  %v905 = vpop.f32.mrb[0].mxu0
  %v906 = vadd.f32 0.0, %v905
  %v907 = vpop.f32.mrb[0].mxu0
  %908 = vmatprep.mubr.bf16.mxu0 %v178
  %909 = vmatmul.mubr.bf16.gmra.mrb[0].mxu0 %v177
  %v910 = vpop.f32.mrb[0].mxu0
  %v911 = vadd.f32 0.0, %v910
  %v912 = vpop.f32.mrb[0].mxu0
  %v913 = vpop.f32.mrb[0].mxu0
  %v914 = vadd.f32 0.0, %v913
  %v915 = vpop.f32.mrb[0].mxu0
  %916 = vmatprep.mubr.bf16.mxu0 %v180
  %917 = vmatmul.mubr.bf16.gmra.mrb[0].mxu0 %v179
  %v918 = vpop.f32.mrb[0].mxu0
  %v919 = vadd.f32 0.0, %v918
  %v920 = vpop.f32.mrb[0].mxu0
  %v921 = vpop.f32.mrb[0].mxu0
  %v922 = vadd.f32 0.0, %v921
  %v923 = vpop.f32.mrb[0].mxu0
  %924 = vmatprep.mubr.bf16.mxu0 %v182
  %925 = vmatmul.mubr.bf16.gmra.mrb[0].mxu0 %v181
  %v926 = vpop.f32.mrb[0].mxu0
  %v927 = vadd.f32 0.0, %v926
  %v928 = vpop.f32.mrb[0].mxu0
  %v929 = vpop.f32.mrb[0].mxu0
  %v930 = vadd.f32 0.0, %v929
  %v931 = vpop.f32.mrb[0].mxu0
  %932 = vmatprep.mubr.bf16.mxu0 %v184
  %933 = vmatmul.mubr.bf16.gmra.mrb[0].mxu0 %v183
  %v934 = vpop.f32.mrb[0].mxu0
  %v935 = vadd.f32 0.0, %v934
  %v936 = vpop.f32.mrb[0].mxu0
  %v937 = vpop.f32.mrb[0].mxu0
  %v938 = vadd.f32 0.0, %v937
  %v939 = vpop.f32.mrb[0].mxu0
  %940 = vmatprep.mubr.bf16.mxu0 %v186
  %941 = vmatmul.mubr.bf16.gmra.mrb[0].mxu0 %v185
  %v942 = vpop.f32.mrb[0].mxu0
  %v943 = vadd.f32 0.0, %v942
  %v944 = vpop.f32.mrb[0].mxu0
  %v945 = vpop.f32.mrb[0].mxu0
  %v946 = vadd.f32 0.0, %v945
  %v947 = vpop.f32.mrb[0].mxu0
  %948 = vmatprep.mubr.bf16.mxu0 %v188
  %949 = vmatmul.mubr.bf16.gmra.mrb[0].mxu0 %v187
  %v950 = vpop.f32.mrb[0].mxu0
  %v951 = vadd.f32 0.0, %v950
  %v952 = vpop.f32.mrb[0].mxu0
  %v953 = vpop.f32.mrb[0].mxu0
  %v954 = vadd.f32 0.0, %v953
  %v955 = vpop.f32.mrb[0].mxu0
  %956 = vmatprep.mubr.bf16.mxu0 %v190
  %957 = vmatmul.mubr.bf16.gmra.mrb[0].mxu0 %v189
  %v958 = vpop.f32.mrb[0].mxu0
  %v959 = vadd.f32 0.0, %v958
  %v960 = vpop.f32.mrb[0].mxu0
  %v961 = vpop.f32.mrb[0].mxu0
  %v962 = vadd.f32 0.0, %v961
  %v963 = vpop.f32.mrb[0].mxu0
  %964 = vmatprep.mubr.bf16.mxu0 %v192
  %965 = vmatmul.mubr.bf16.gmra.mrb[0].mxu0 %v191
  %v966 = vpop.f32.mrb[0].mxu0
  %v967 = vadd.f32 0.0, %v966
  %v968 = vpop.f32.mrb[0].mxu0
  %v969 = vpop.f32.mrb[0].mxu0
  %v970 = vadd.f32 0.0, %v969
  %v971 = vpop.f32.mrb[0].mxu0
  %972 = vmatprep.mubr.bf16.mxu0 %v194
  %973 = vmatmul.mubr.bf16.gmra.mrb[0].mxu0 %v193
  %v974 = vpop.f32.mrb[0].mxu0
  %v975 = vadd.f32 0.0, %v974
  %v976 = vpop.f32.mrb[0].mxu0
  %v977 = vpop.f32.mrb[0].mxu0
  %v978 = vadd.f32 0.0, %v977
  %v979 = vpop.f32.mrb[0].mxu0
  %980 = vmatprep.mubr.bf16.mxu0 %v196
  %981 = vmatmul.mubr.bf16.gmra.mrb[0].mxu0 %v195
  %v982 = vpop.f32.mrb[0].mxu0
  %v983 = vadd.f32 0.0, %v982
  %v984 = vpop.f32.mrb[0].mxu0
  %v985 = vpop.f32.mrb[0].mxu0
  %v986 = vadd.f32 0.0, %v985
  %v987 = vpop.f32.mrb[0].mxu0
  %988 = vmatprep.mubr.bf16.mxu0 %v198
  %989 = vmatmul.mubr.bf16.gmra.mrb[0].mxu0 %v197
  %v990 = vpop.f32.mrb[0].mxu0
  %v991 = vadd.f32 0.0, %v990
  %v992 = vpop.f32.mrb[0].mxu0
  %v993 = vpop.f32.mrb[0].mxu0
  %v994 = vadd.f32 0.0, %v993
  %v995 = vpop.f32.mrb[0].mxu0
  %996 = vmatprep.mubr.bf16.mxu0 %v200
  %997 = vmatmul.mubr.bf16.gmra.mrb[0].mxu0 %v199
  %v998 = vpop.f32.mrb[0].mxu0
  %v999 = vadd.f32 0.0, %v998
  %v1000 = vpop.f32.mrb[0].mxu0
  %v1001 = vpop.f32.mrb[0].mxu0
  %v1002 = vadd.f32 0.0, %v1001
  %v1003 = vpop.f32.mrb[0].mxu0
  %1004 = vmatprep.mubr.bf16.mxu0 %v202
  %1005 = vmatmul.mubr.bf16.gmra.mrb[0].mxu0 %v201
  %v1006 = vpop.f32.mrb[0].mxu0
  %v1007 = vadd.f32 0.0, %v1006
  %v1008 = vpop.f32.mrb[0].mxu0
  %v1009 = vpop.f32.mrb[0].mxu0
  %v1010 = vadd.f32 0.0, %v1009
  %v1011 = vpop.f32.mrb[0].mxu0
  %1012 = vmatprep.mubr.bf16.mxu0 %v204
  %1013 = vmatmul.mubr.bf16.gmra.mrb[0].mxu0 %v203
  %v1014 = vpop.f32.mrb[0].mxu0
  %v1015 = vadd.f32 0.0, %v1014
  %v1016 = vpop.f32.mrb[0].mxu0
  %v1017 = vpop.f32.mrb[0].mxu0
  %v1018 = vadd.f32 0.0, %v1017
  %v1019 = vpop.f32.mrb[0].mxu0
  %1020 = vmatprep.mubr.bf16.mxu0 %v206
  %1021 = vmatmul.mubr.bf16.gmra.mrb[0].mxu0 %v205
  %v1022 = vpop.f32.mrb[0].mxu0
  %v1023 = vadd.f32 0.0, %v1022
  %v1024 = vpop.f32.mrb[0].mxu0
  %v1025 = vpop.f32.mrb[0].mxu0
  %v1026 = vadd.f32 0.0, %v1025
  %v1027 = vpop.f32.mrb[0].mxu0
  %1028 = vdwg.mxu0
  %vm1029 = vcmask 64512
  %1030 = vst.msk [vmem:[%s3] sm:$0xff] %vm1029, %v903
  %1031 = vst.msk [vmem:[%s3 + $0x8] sm:$0xff] %vm1029, %v906
  %1032 = vst.msk [vmem:[%s3 + $0x10] sm:$0xff] %vm1029, %v911
  %1033 = vst.msk [vmem:[%s3 + $0x18] sm:$0xff] %vm1029, %v914
  %1034 = vst.msk [vmem:[%s3 + $0x20] sm:$0xff] %vm1029, %v919
  %1035 = vst.msk [vmem:[%s3 + $0x28] sm:$0xff] %vm1029, %v922
  %1036 = vst.msk [vmem:[%s3 + $0x30] sm:$0xff] %vm1029, %v927
  %1037 = vst.msk [vmem:[%s3 + $0x38] sm:$0xff] %vm1029, %v930
  %1038 = vst.msk [vmem:[%s3 + $0x40] sm:$0xff] %vm1029, %v935
  %1039 = vst.msk [vmem:[%s3 + $0x48] sm:$0xff] %vm1029, %v938
  %1040 = vst.msk [vmem:[%s3 + $0x50] sm:$0xff] %vm1029, %v943
  %1041 = vst.msk [vmem:[%s3 + $0x58] sm:$0xff] %vm1029, %v946
  %1042 = vst.msk [vmem:[%s3 + $0x60] sm:$0xff] %vm1029, %v951
  %1043 = vst.msk [vmem:[%s3 + $0x68] sm:$0xff] %vm1029, %v954
  %1044 = vst.msk [vmem:[%s3 + $0x70] sm:$0xff] %vm1029, %v959
  %1045 = vst.msk [vmem:[%s3 + $0x78] sm:$0xff] %vm1029, %v962
  %1046 = vst.msk [vmem:[%s3 + $0x80] sm:$0xff] %vm1029, %v967
  %1047 = vst.msk [vmem:[%s3 + $0x88] sm:$0xff] %vm1029, %v970
  %1048 = vst.msk [vmem:[%s3 + $0x90] sm:$0xff] %vm1029, %v975
  %1049 = vst.msk [vmem:[%s3 + $0x98] sm:$0xff] %vm1029, %v978
  %1050 = vst.msk [vmem:[%s3 + $0xa0] sm:$0xff] %vm1029, %v983
  %1051 = vst.msk [vmem:[%s3 + $0xa8] sm:$0xff] %vm1029, %v986
  %1052 = vst.msk [vmem:[%s3 + $0xb0] sm:$0xff] %vm1029, %v991
  %1053 = vst.msk [vmem:[%s3 + $0xb8] sm:$0xff] %vm1029, %v994
  %1054 = vst.msk [vmem:[%s3 + $0xc0] sm:$0xff] %vm1029, %v999
  %1055 = vst.msk [vmem:[%s3 + $0xc8] sm:$0xff] %vm1029, %v1002
  %1056 = vst.msk [vmem:[%s3 + $0xd0] sm:$0xff] %vm1029, %v1007
  %1057 = vst.msk [vmem:[%s3 + $0xd8] sm:$0xff] %vm1029, %v1010
  %1058 = vst.msk [vmem:[%s3 + $0xe0] sm:$0xff] %vm1029, %v1015
  %1059 = vst.msk [vmem:[%s3 + $0xe8] sm:$0xff] %vm1029, %v1018
  %1060 = vst.msk [vmem:[%s3 + $0xf0] sm:$0xff] %vm1029, %v1023
  %1061 = vst.msk [vmem:[%s3 + $0xf8] sm:$0xff] %vm1029, %v1026
  // Predicated region
  $region14: #{cached_gcn_forward.1} parent=0 // pred_check
    _
  $region15: #{cached_gcn_forward.1} parent=0 // pred_check_branch
    %1063 = sbr.rel (0) target = $region17
  $region16: #{cached_gcn_forward.1} parent=0 // pred_region
    _
  $region17: #{cached_gcn_forward.1} parent=0 // pred_fallthru
    _
  // Predicated region
  $region18: #{cached_gcn_forward.1} parent=0 // pred_check
    _
  $region19: #{cached_gcn_forward.1} parent=0 // pred_check_branch
    %1065 = sbr.rel (0) target = $region21
  $region20: #{cached_gcn_forward.1} parent=0 // pred_region
    _
  $region21: #{cached_gcn_forward.1} parent=0 // pred_fallthru
    _

</llo_original>
